<compile_context>
chip_gen: v6e
topology: v6e:2x2x1
jax: 0.10.0
libtpu: 0.0.40
codegen_flags: <defaults>
</compile_context>

<pallas_src>
import functools

import jax
import jax.numpy as jnp
from jax.experimental import pallas as pl
from jax.experimental.pallas import tpu as pltpu


def _round_up(n, m):
    return ((n + m - 1) // m) * m


def _tile_plan(num_rows, row_bytes):
    """Rows (whole images) per grid step, padded rows, grid steps, VMEM limit."""
    try:  # generation-aware tile target: v5e/v6e have 128 MiB VMEM, v7x 64 MiB/TC
        vmem_cap = int(getattr(pltpu.get_tpu_info(), "vmem_capacity_bytes", 64 << 20))
    except Exception:
        vmem_cap = 64 << 20
    target_in_bytes = (4 << 20) if vmem_cap >= (96 << 20) else (2 << 20)

    rows8 = _round_up(num_rows, 8)
    t = max(8, (target_in_bytes // max(row_bytes, 1)) // 8 * 8)
    # Keep >= ~4 grid steps when possible so the "parallel" grid axis can be
    # sharded across both v7x TensorCores (and pipelining has some depth).
    t = min(t, max(8, _round_up(-(-rows8 // 4), 8)))
    t = min(t, rows8)
    rows_pad = _round_up(rows8, t)          # no partial blocks
    grid_steps = rows_pad // t

    # Live VMEM: double-buffered (1 input + 2 output) tiles + slack for the
    # mask block / compiler scratch.  Never request the whole chip.
    need = 2 * 3 * t * row_bytes + (4 << 20)
    vmem_limit = max(16 << 20, min(need, vmem_cap - (16 << 20)))
    return t, rows_pad, grid_steps, vmem_limit


def _grad_flat_kernel(m_ref, x_ref, dx_ref, dy_ref, *, W, HW):
    """Flat path (W < 128): one image per sublane row, HW lanes.

    m_ref: (4, HW) float edge masks [last-col, first-col, last-row, first-row],
    precomputed in the wrapper (hoisted out of the per-step body).
    """
    x = x_ref[...]                                  # (T, HW)

    # dx first, store it, then dy: at most two neighbour temporaries live.
    x_e = pltpu.roll(x, shift=HW - 1, axis=1)       # x[i + 1]  (right neighbour)
    x_w = pltpu.roll(x, shift=1, axis=1)            # x[i - 1]  (left neighbour)
    x_e = jnp.where(m_ref[0:1, :] > 0.5, x, x_e)    # replicate last column
    x_w = jnp.where(m_ref[1:2, :] > 0.5, x, x_w)    # replicate first column
    dx_ref[...] = 0.5 * (x_e - x_w)

    x_s = pltpu.roll(x, shift=HW - W, axis=1)       # x[i + W]  (row below)
    x_n = pltpu.roll(x, shift=W, axis=1)            # x[i - W]  (row above)
    x_s = jnp.where(m_ref[2:3, :] > 0.5, x, x_s)    # replicate last row
    x_n = jnp.where(m_ref[3:4, :] > 0.5, x, x_n)    # replicate first row
    dy_ref[...] = 0.5 * (x_s - x_n)


def _grad_3d_kernel(x_ref, dx_ref, dy_ref, *, H, W):
    """3D path (W >= 128): (T, H, W) blocks, lane axis = W.

    Horizontal neighbours: lane rolls + lane-iota edge compare (no modulo).
    Vertical neighbours: sublane rolls + sublane-iota edge compare.
    """
    x = x_ref[...]                                  # (T, H, W)

    lane = jax.lax.broadcasted_iota(jnp.int32, (1, H, W), 2)
    x_e = pltpu.roll(x, shift=W - 1, axis=2)        # right neighbour
    x_w = pltpu.roll(x, shift=1, axis=2)            # left neighbour
    x_e = jnp.where(lane == W - 1, x, x_e)          # replicate last column
    x_w = jnp.where(lane == 0, x, x_w)              # replicate first column
    dx_ref[...] = 0.5 * (x_e - x_w)

    row = jax.lax.broadcasted_iota(jnp.int32, (1, H, W), 1)
    x_s = pltpu.roll(x, shift=H - 1, axis=1)        # row below (sublane roll)
    x_n = pltpu.roll(x, shift=1, axis=1)            # row above
    x_s = jnp.where(row == H - 1, x, x_s)           # replicate last row
    x_n = jnp.where(row == 0, x, x_n)               # replicate first row
    dy_ref[...] = 0.5 * (x_s - x_n)


def gradient_batch(img):
    """img: (B, C, H, W) float32 -> (dx, dy), each (B, C, H, W).

    Matches PyTorch GradientBatch: replication-padded central differences.
    """
    B, C, H, W = img.shape
    BC, HW = B * C, H * W
    itemsize = jnp.dtype(img.dtype).itemsize
    T, rows_pad, grid_steps, vmem_limit = _tile_plan(BC, HW * itemsize)

    cparams = pltpu.CompilerParams(
        dimension_semantics=("parallel",),   # shards the row-grid across v7x TCs
        vmem_limit_bytes=int(vmem_limit),
    )

    if W >= 128:
        x = img.reshape(BC, H, W)
        if rows_pad != BC:
            x = jnp.pad(x, ((0, rows_pad - BC), (0, 0), (0, 0)))
        kernel = functools.partial(_grad_3d_kernel, H=H, W=W)
        dx, dy = pl.pallas_call(
            kernel,
            out_shape=(
                jax.ShapeDtypeStruct((rows_pad, H, W), img.dtype),
                jax.ShapeDtypeStruct((rows_pad, H, W), img.dtype),
            ),
            grid=(grid_steps,),
            in_specs=[pl.BlockSpec((T, H, W), lambda i: (i, 0, 0))],
            out_specs=(
                pl.BlockSpec((T, H, W), lambda i: (i, 0, 0)),
                pl.BlockSpec((T, H, W), lambda i: (i, 0, 0)),
            ),
            compiler_params=cparams,
        )(x)
    else:
        x = img.reshape(BC, HW)
        if rows_pad != BC:
            x = jnp.pad(x, ((0, rows_pad - BC), (0, 0)))
        # Edge masks hoisted out of the kernel body: computed once here.
        lane = jnp.arange(HW, dtype=jnp.int32)
        col = lane % W
        masks = jnp.stack(
            [col == W - 1, col == 0, lane >= HW - W, lane < W]
        ).astype(jnp.float32)                       # (4, HW)
        kernel = functools.partial(_grad_flat_kernel, W=W, HW=HW)
        dx, dy = pl.pallas_call(
            kernel,
            out_shape=(
                jax.ShapeDtypeStruct((rows_pad, HW), img.dtype),
                jax.ShapeDtypeStruct((rows_pad, HW), img.dtype),
            ),
            grid=(grid_steps,),
            in_specs=[
                pl.BlockSpec((4, HW), lambda i: (0, 0)),   # same tiny block every step
                pl.BlockSpec((T, HW), lambda i: (i, 0)),
            ],
            out_specs=(
                pl.BlockSpec((T, HW), lambda i: (i, 0)),
                pl.BlockSpec((T, HW), lambda i: (i, 0)),
            ),
            compiler_params=cparams,
        )(masks, x)

    dx = dx[:BC].reshape(B, C, H, W)
    dy = dy[:BC].reshape(B, C, H, W)
    return dx, dy


def _reference(img):
    # pure-JAX reference (replication-padded central differences)
    x = img
    x_r = jnp.concatenate([x[..., 1:], x[..., -1:]], axis=-1)
    x_l = jnp.concatenate([x[..., :1], x[..., :-1]], axis=-1)
    dx = 0.5 * (x_r - x_l)
    x_d = jnp.concatenate([x[..., 1:, :], x[..., -1:, :]], axis=-2)
    x_u = jnp.concatenate([x[..., :1, :], x[..., :-1, :]], axis=-2)
    dy = 0.5 * (x_d - x_u)
    return dx, dy


if __name__ == "__main__":
    key = jax.random.PRNGKey(0)

    # Small shape from the module spec (flat / W<128 path).
    img = jax.random.normal(key, (2, 4, 16, 16), dtype=jnp.float32)
    dx, dy = gradient_batch(img)
    jax.block_until_ready((dx, dy))
    dx_ref, dy_ref = _reference(img)
    assert dx.shape == (2, 4, 16, 16) and dy.shape == (2, 4, 16, 16)
    assert jnp.allclose(dx, dx_ref, atol=1e-6)
    assert jnp.allclose(dy, dy_ref, atol=1e-6)

    # Small check of the lane-dense 3D path used for realistic resolutions.
    img2 = jax.random.normal(jax.random.PRNGKey(0), (1, 2, 8, 128), dtype=jnp.float32)
    dx2, dy2 = gradient_batch(img2)
    jax.block_until_ready((dx2, dy2))
    dx2_ref, dy2_ref = _reference(img2)
    assert jnp.allclose(dx2, dx2_ref, atol=1e-6)
    assert jnp.allclose(dy2, dy2_ref, atol=1e-6)

    print("KERNEL_OK")
</pallas_src>

<mosaic_0001>
module attributes {stable_mosaic.version = 11 : i64} {
  func.func @_grad_flat_kernel(%arg0: i32, %arg1: memref<4x256xf32, #tpu.memory_space<vmem>>, %arg2: memref<8x256xf32, #tpu.memory_space<vmem>>, %arg3: memref<8x256xf32, #tpu.memory_space<vmem>>, %arg4: memref<8x256xf32, #tpu.memory_space<vmem>>) attributes {dimension_semantics = [#tpu.dimension_semantics<parallel>], iteration_bounds = array<i64: 1>, scalar_prefetch = 0 : i64, scratch_operands = 0 : i64, tpu.core_type = #tpu.core_type<tc>, window_params = [{pipeline_mode = #tpu.pipeline_mode<synchronous>, transform_indices = @transform_0, window_bounds = array<i64: 4, 256>}, {transform_indices = @transform_1, window_bounds = array<i64: 8, 256>}, {transform_indices = @transform_2, window_bounds = array<i64: 8, 256>}, {transform_indices = @transform_3, window_bounds = array<i64: 8, 256>}]} {
    %c0 = arith.constant 0 : index
    %c0_0 = arith.constant 0 : index
    %0 = vector.load %arg2[%c0, %c0_0] : memref<8x256xf32, #tpu.memory_space<vmem>>, vector<8x256xf32>
    %c255_i32 = arith.constant 255 : i32
    %1 = tpu.dynamic_rotate %0 by %c255_i32 dim 1 : vector<8x256xf32>, i32 -> vector<8x256xf32>
    %c1_i32 = arith.constant 1 : i32
    %2 = tpu.dynamic_rotate %0 by %c1_i32 dim 1 : vector<8x256xf32>, i32 -> vector<8x256xf32>
    %c0_1 = arith.constant 0 : index
    %c0_2 = arith.constant 0 : index
    %3 = vector.load %arg1[%c0_1, %c0_2] : memref<4x256xf32, #tpu.memory_space<vmem>>, vector<1x256xf32>
    %cst = arith.constant 5.000000e-01 : f32
    %4 = vector.broadcast %cst : f32 to vector<1x256xf32>
    %5 = arith.cmpf ogt, %3, %4 : vector<1x256xf32>
    %6 = vector.shape_cast %5 : vector<1x256xi1> to vector<1x256xi1>
    %7 = vector.broadcast %6 : vector<1x256xi1> to vector<8x256xi1>
    %8 = arith.select %7, %0, %1 : vector<8x256xi1>, vector<8x256xf32>
    %c1 = arith.constant 1 : index
    %c0_3 = arith.constant 0 : index
    %9 = vector.load %arg1[%c1, %c0_3] : memref<4x256xf32, #tpu.memory_space<vmem>>, vector<1x256xf32>
    %cst_4 = arith.constant 5.000000e-01 : f32
    %10 = vector.broadcast %cst_4 : f32 to vector<1x256xf32>
    %11 = arith.cmpf ogt, %9, %10 : vector<1x256xf32>
    %12 = vector.shape_cast %11 : vector<1x256xi1> to vector<1x256xi1>
    %13 = vector.broadcast %12 : vector<1x256xi1> to vector<8x256xi1>
    %14 = arith.select %13, %0, %2 : vector<8x256xi1>, vector<8x256xf32>
    %15 = arith.subf %8, %14 : vector<8x256xf32>
    %cst_5 = arith.constant 5.000000e-01 : f32
    %16 = vector.broadcast %cst_5 : f32 to vector<8x256xf32>
    %17 = arith.mulf %16, %15 : vector<8x256xf32>
    %c0_6 = arith.constant 0 : index
    %c0_7 = arith.constant 0 : index
    %18 = vector.load %arg3[%c0_6, %c0_7] : memref<8x256xf32, #tpu.memory_space<vmem>>, vector<8x256xf32>
    tpu.vector_store %arg3[%c0_6, %c0_7], %17 {strides = array<i32>} : memref<8x256xf32, #tpu.memory_space<vmem>>, vector<8x256xf32>,
    %c240_i32 = arith.constant 240 : i32
    %19 = tpu.dynamic_rotate %0 by %c240_i32 dim 1 : vector<8x256xf32>, i32 -> vector<8x256xf32>
    %c16_i32 = arith.constant 16 : i32
    %20 = tpu.dynamic_rotate %0 by %c16_i32 dim 1 : vector<8x256xf32>, i32 -> vector<8x256xf32>
    %c2 = arith.constant 2 : index
    %c0_8 = arith.constant 0 : index
    %21 = vector.load %arg1[%c2, %c0_8] : memref<4x256xf32, #tpu.memory_space<vmem>>, vector<1x256xf32>
    %cst_9 = arith.constant 5.000000e-01 : f32
    %22 = vector.broadcast %cst_9 : f32 to vector<1x256xf32>
    %23 = arith.cmpf ogt, %21, %22 : vector<1x256xf32>
    %24 = vector.shape_cast %23 : vector<1x256xi1> to vector<1x256xi1>
    %25 = vector.broadcast %24 : vector<1x256xi1> to vector<8x256xi1>
    %26 = arith.select %25, %0, %19 : vector<8x256xi1>, vector<8x256xf32>
    %c3 = arith.constant 3 : index
    %c0_10 = arith.constant 0 : index
    %27 = vector.load %arg1[%c3, %c0_10] : memref<4x256xf32, #tpu.memory_space<vmem>>, vector<1x256xf32>
    %cst_11 = arith.constant 5.000000e-01 : f32
    %28 = vector.broadcast %cst_11 : f32 to vector<1x256xf32>
    %29 = arith.cmpf ogt, %27, %28 : vector<1x256xf32>
    %30 = vector.shape_cast %29 : vector<1x256xi1> to vector<1x256xi1>
    %31 = vector.broadcast %30 : vector<1x256xi1> to vector<8x256xi1>
    %32 = arith.select %31, %0, %20 : vector<8x256xi1>, vector<8x256xf32>
    %33 = arith.subf %26, %32 : vector<8x256xf32>
    %cst_12 = arith.constant 5.000000e-01 : f32
    %34 = vector.broadcast %cst_12 : f32 to vector<8x256xf32>
    %35 = arith.mulf %34, %33 : vector<8x256xf32>
    %c0_13 = arith.constant 0 : index
    %c0_14 = arith.constant 0 : index
    %36 = vector.load %arg4[%c0_13, %c0_14] : memref<8x256xf32, #tpu.memory_space<vmem>>, vector<8x256xf32>
    tpu.vector_store %arg4[%c0_13, %c0_14], %35 {strides = array<i32>} : memref<8x256xf32, #tpu.memory_space<vmem>>, vector<8x256xf32>,
    return
  }
  func.func @transform_0(%arg0: i32) -> (i32, i32) {
    %c0_i32 = arith.constant 0 : i32
    %c0_i32_0 = arith.constant 0 : i32
    %c0_i32_1 = arith.constant 0 : i32
    return %c0_i32, %c0_i32_0 : i32, i32
  }
  func.func @transform_1(%arg0: i32) -> (i32, i32) {
    %c0_i32 = arith.constant 0 : i32
    %c0_i32_0 = arith.constant 0 : i32
    return %arg0, %c0_i32 : i32, i32
  }
  func.func @transform_2(%arg0: i32) -> (i32, i32) {
    %c0_i32 = arith.constant 0 : i32
    %c0_i32_0 = arith.constant 0 : i32
    return %arg0, %c0_i32 : i32, i32
  }
  func.func @transform_3(%arg0: i32) -> (i32, i32) {
    %c0_i32 = arith.constant 0 : i32
    %c0_i32_0 = arith.constant 0 : i32
    return %arg0, %c0_i32 : i32, i32
  }
}

</mosaic_0001>

<llo_original>
// kernel: tpu_custom_call.1
$region0: #{tpu_custom_call.1}
  #allocation0 [shape = 'u32[]', space=smem, size = 0x4, offset = 0x4, fixed_abs, tag = 'smem constant byte address 0x4 - core index']
  #allocation1 [shape = 'u32[144,128]{1,0:T(1,128)}', space=vmem, size = 0x12000, scoped, tag = 'internal scratch']
  %s0 = inlined_call_operand.hbm [shape: f32[4,256], index: 0, kind: input, shape index: {}]
  %s1 = inlined_call_operand.hbm [shape: f32[8,256], index: 1, kind: input, shape index: {}]
  %s2 = inlined_call_operand.hbm [shape: f32[8,256], index: 2, kind: output, shape index: {0}]
  %s3 = inlined_call_operand.hbm [shape: f32[8,256], index: 3, kind: output, shape index: {1}]
  %4 = xla_tuple %s2, %s3
  %s5 = sld [smem:[#allocation0]]
  $region34: #{tpu_custom_call.1} parent=0
    _
  %s7 = ssub.s32 1, %s5
  %s8 = scalar_select 0, %s7, %s5
  $region1: #{tpu_custom_call.1} parent=0
    #allocation2 [shape = 'u8[4096]{0}', space=vmem, size = 0x1000, scoped, tag = 'input window, operand 0, single buffered']
    #allocation3 [shape = 's32[1]{0}', space=sflag, size = 0x4, scoped, tag = 'scoped memory for tpu_custom_call.1']
    #allocation4 [shape = 's32[1]{0}', space=sflag, size = 0x4, scoped, tag = 'scoped memory for tpu_custom_call.1']
    #allocation5 [shape = 'u8[8192]{0}', space=vmem, size = 0x2000, scoped, tag = 'input window, operand 1, single buffered']
    #allocation6 [shape = 's32[1]{0}', space=sflag, size = 0x4, scoped, tag = 'scoped memory for tpu_custom_call.1']
    #allocation7 [shape = 'u8[8192]{0}', space=vmem, size = 0x2000, scoped, tag = 'output window, operand 0, single buffered']
    #allocation8 [shape = 'u8[8192]{0}', space=vmem, size = 0x2000, scoped, tag = 'output window, operand 1, single buffered']
    #allocation9 [shape = 's32[1]{0}', space=sflag, size = 0x4, scoped, tag = 'scoped memory for tpu_custom_call.1']
    %9 = vsyncpa [#allocation3], 0
    %10 = vsyncpa [#allocation6], 0
    %11 = vsyncpa [#allocation4], 0
    %12 = vsyncpa [#allocation9], 0
    // Predicated region
    $region2: #{tpu_custom_call.1} parent=1 // pred_check
      _
    $region3: #{tpu_custom_call.1} parent=1 // pred_check_branch
      %14 = sbr.rel (0) target = $region5
    $region4: #{tpu_custom_call.1} parent=1 // pred_region
      %s16 = ssub.s32 128, 128
      %17 = vsyncadd [#allocation3], %s16
      %s19 = sshll.u32 [#allocation2], 4
      %s20 = int_to_ptr.vmem [resolvable:$true] %s19
      %22 = dma.hbm_to_vmem [thread:$0]  %s0, 128, %s20, [#allocation3]
    $region5: #{tpu_custom_call.1} parent=1 // pred_fallthru
      _
    // Predicated region
    $region6: #{tpu_custom_call.1} parent=1 // pred_check
      _
    $region7: #{tpu_custom_call.1} parent=1 // pred_check_branch
      %24 = sbr.rel (0) target = $region9
    $region8: #{tpu_custom_call.1} parent=1 // pred_region
      %s26 = ssub.s32 256, 256
      %27 = vsyncadd [#allocation6], %s26
      %s29 = sshll.u32 [#allocation5], 4
      %s30 = int_to_ptr.vmem [resolvable:$true] %s29
      %32 = dma.hbm_to_vmem [thread:$0]  %s1, 256, %s30, [#allocation6]
    $region9: #{tpu_custom_call.1} parent=1 // pred_fallthru
      _
    // Predicated region
    $region10: #{tpu_custom_call.1} parent=1 // pred_check
      _
    $region11: #{tpu_custom_call.1} parent=1 // pred_check_branch
      %34 = sbr.rel (0) target = $region13
    $region12: #{tpu_custom_call.1} parent=1 // pred_region
      %35 = dma.done [#allocation3], 128
    $region13: #{tpu_custom_call.1} parent=1 // pred_fallthru
      _
    // Predicated region
    $region14: #{tpu_custom_call.1} parent=1 // pred_check
      _
    $region15: #{tpu_custom_call.1} parent=1 // pred_check_branch
      %37 = sbr.rel (0) target = $region17
    $region16: #{tpu_custom_call.1} parent=1 // pred_region
      %38 = dma.done [#allocation6], 256
    $region17: #{tpu_custom_call.1} parent=1 // pred_fallthru
      _
    %v39 = vld [vmem:[#allocation5] sm:$0xff]
    %v40 = vld [vmem:[#allocation5 + $0x8] sm:$0xff]
    %41 = vrot.lane.b32.xlu0 %v39, 127
    %v42 = vpop.permute.xlu0 %41
    %43 = vrot.lane.b32.xlu0 %v40, 127
    %v44 = vpop.permute.xlu0 %43
    %v45 = vlaneseq
    %v46 = vand.u32 %v45, 127
    %vm47 = vcmp.lt.s32.totalorder %v46, 127
    %v48 = vsel %vm47, %v42, %v44
    %v49 = vsel %vm47, %v44, %v42
    %50 = vrot.lane.b32.xlu0 %v39, 1
    %v51 = vpop.permute.xlu0 %50
    %52 = vrot.lane.b32.xlu0 %v40, 1
    %v53 = vpop.permute.xlu0 %52
    %vm54 = vcmp.lt.s32.totalorder %v46, 1
    %v55 = vsel %vm54, %v51, %v53
    %v56 = vsel %vm54, %v53, %v51
    %v57 = vld [vmem:[#allocation2] ss:$4 sm:$0x3]
    %vm58 = vcmp.gt.f32.partialorder %v57, 0.5
    %v59 = vsel %vm58, 1, 0
    %v60 = vlaneseq
    %v61 = vshrl.u32 %v60, 7
    %v62 = vsub.s32 0, %v61
    %v63 = vrot.slane %v59, %v62
    %v64 = vlaneseq
    %v65 = vshrl.u32 %v64, 7
    %v66 = vsub.s32 1, %v65
    %v67 = vrot.slane %v59, %v66
    %vm68 = vcmp.eq.s32.totalorder %v63, 1
    %vm69 = vcmp.eq.s32.totalorder %v67, 1
    %v70 = vsel %vm68, %v39, %v48
    %v71 = vsel %vm69, %v40, %v49
    %s72 = scalar_lea.vmem [#allocation2], 1
    %v73 = vld [vmem:[%s72] ss:$4 sm:$0x3]
    %vm74 = vcmp.gt.f32.partialorder %v73, 0.5
    %v75 = vsel %vm74, 1, 0
    %v76 = vlaneseq
    %v77 = vshrl.u32 %v76, 7
    %v78 = vsub.s32 0, %v77
    %v79 = vrot.slane %v75, %v78
    %v80 = vlaneseq
    %v81 = vshrl.u32 %v80, 7
    %v82 = vsub.s32 1, %v81
    %v83 = vrot.slane %v75, %v82
    %vm84 = vcmp.eq.s32.totalorder %v79, 1
    %vm85 = vcmp.eq.s32.totalorder %v83, 1
    %v86 = vsel %vm84, %v39, %v56
    %v87 = vsel %vm85, %v40, %v55
    %v88 = vsub.f32 %v70, %v86
    %v89 = vsub.f32 %v71, %v87
    %v90 = vmul.f32 %v88, 0.5
    %v91 = vmul.f32 %v89, 0.5
    %92 = vst [vmem:[#allocation7] sm:$0xff] %v90
    %93 = vst [vmem:[#allocation7 + $0x8] sm:$0xff] %v91
    %94 = vrot.lane.b32.xlu0 %v39, 112
    %v95 = vpop.permute.xlu0 %94
    %96 = vrot.lane.b32.xlu0 %v40, 112
    %v97 = vpop.permute.xlu0 %96
    %vm98 = vcmp.lt.s32.totalorder %v46, 112
    %v99 = vsel %vm98, %v95, %v97
    %v100 = vsel %vm98, %v97, %v95
    %101 = vrot.lane.b32.xlu0 %v39, 16
    %v102 = vpop.permute.xlu0 %101
    %103 = vrot.lane.b32.xlu0 %v40, 16
    %v104 = vpop.permute.xlu0 %103
    %vm105 = vcmp.lt.s32.totalorder %v46, 16
    %v106 = vsel %vm105, %v102, %v104
    %v107 = vsel %vm105, %v104, %v102
    %s108 = scalar_lea.vmem [#allocation2], 2
    %v109 = vld [vmem:[%s108] ss:$4 sm:$0x3]
    %vm110 = vcmp.gt.f32.partialorder %v109, 0.5
    %v111 = vsel %vm110, 1, 0
    %v112 = vlaneseq
    %v113 = vshrl.u32 %v112, 7
    %v114 = vsub.s32 0, %v113
    %v115 = vrot.slane %v111, %v114
    %v116 = vlaneseq
    %v117 = vshrl.u32 %v116, 7
    %v118 = vsub.s32 1, %v117
    %v119 = vrot.slane %v111, %v118
    %vm120 = vcmp.eq.s32.totalorder %v115, 1
    %vm121 = vcmp.eq.s32.totalorder %v119, 1
    %v122 = vsel %vm120, %v39, %v99
    %v123 = vsel %vm121, %v40, %v100
    %s124 = scalar_lea.vmem [#allocation2], 3
    %v125 = vld [vmem:[%s124] ss:$4 sm:$0x3]
    %vm126 = vcmp.gt.f32.partialorder %v125, 0.5
    %v127 = vsel %vm126, 1, 0
    %v128 = vlaneseq
    %v129 = vshrl.u32 %v128, 7
    %v130 = vsub.s32 0, %v129
    %v131 = vrot.slane %v127, %v130
    %v132 = vlaneseq
    %v133 = vshrl.u32 %v132, 7
    %v134 = vsub.s32 1, %v133
    %v135 = vrot.slane %v127, %v134
    %vm136 = vcmp.eq.s32.totalorder %v131, 1
    %vm137 = vcmp.eq.s32.totalorder %v135, 1
    %v138 = vsel %vm136, %v39, %v107
    %v139 = vsel %vm137, %v40, %v106
    %v140 = vsub.f32 %v122, %v138
    %v141 = vsub.f32 %v123, %v139
    %v142 = vmul.f32 %v140, 0.5
    %v143 = vmul.f32 %v141, 0.5
    %144 = vst [vmem:[#allocation8] sm:$0xff] %v142
    %145 = vst [vmem:[#allocation8 + $0x8] sm:$0xff] %v143
    // Predicated region
    $region18: #{tpu_custom_call.1} parent=1 // pred_check
      _
    $region19: #{tpu_custom_call.1} parent=1 // pred_check_branch
      %147 = sbr.rel (0) target = $region21
    $region20: #{tpu_custom_call.1} parent=1 // pred_region
      %s149 = ssub.s32 256, 256
      %150 = vsyncadd [#allocation4], %s149
      %s152 = sshll.u32 [#allocation7], 4
      %s153 = int_to_ptr.vmem [resolvable:$true] %s152
      %155 = dma.vmem_to_hbm [thread:$0]  %s153, 256, %s2, [#allocation4]
    $region21: #{tpu_custom_call.1} parent=1 // pred_fallthru
      _
    // Predicated region
    $region22: #{tpu_custom_call.1} parent=1 // pred_check
      _
    $region23: #{tpu_custom_call.1} parent=1 // pred_check_branch
      %157 = sbr.rel (0) target = $region25
    $region24: #{tpu_custom_call.1} parent=1 // pred_region
      %s159 = ssub.s32 256, 256
      %160 = vsyncadd [#allocation9], %s159
      %s162 = sshll.u32 [#allocation8], 4
      %s163 = int_to_ptr.vmem [resolvable:$true] %s162
      %165 = dma.vmem_to_hbm [thread:$0]  %s163, 256, %s3, [#allocation9]
    $region25: #{tpu_custom_call.1} parent=1 // pred_fallthru
      _
    // Predicated region
    $region26: #{tpu_custom_call.1} parent=1 // pred_check
      _
    $region27: #{tpu_custom_call.1} parent=1 // pred_check_branch
      %167 = sbr.rel (0) target = $region29
    $region28: #{tpu_custom_call.1} parent=1 // pred_region
      %168 = dma.done [#allocation4], 256
    $region29: #{tpu_custom_call.1} parent=1 // pred_fallthru
      _
    // Predicated region
    $region30: #{tpu_custom_call.1} parent=1 // pred_check
      _
    $region31: #{tpu_custom_call.1} parent=1 // pred_check_branch
      %170 = sbr.rel (0) target = $region33
    $region32: #{tpu_custom_call.1} parent=1 // pred_region
      %171 = dma.done [#allocation9], 256
    $region33: #{tpu_custom_call.1} parent=1 // pred_fallthru
      _
    %172 = vsyncpa [#allocation3], 1
    %173 = vsyncpa [#allocation6], 1
    %174 = vsyncpa [#allocation4], 1
    %175 = vsyncpa [#allocation9], 1

</llo_original>
